<compile_context>
chip_gen: v7x
topology: tpu7x:2x2x1
jax: 0.10.0
libtpu: 0.0.40
codegen_flags: <defaults>
</compile_context>

<pallas_src>
import jax
import jax.numpy as jnp
from jax import lax
from jax.experimental import pallas as pl
from jax.experimental.pallas import tpu as pltpu

EPS = 1e-05
_LANES = 128
_SUBLANES = 8


def _vmem_capacity_bytes():
    """Physical per-core VMEM; conservative 64 MiB (v7x) if the query fails."""
    try:
        cap = int(pltpu.get_tpu_info().vmem_capacity_bytes)
    except Exception:
        cap = 64 * 1024 * 1024
    return max(32 * 1024 * 1024, min(cap, 128 * 1024 * 1024))


def _make_dice_kernel(splits, tiles_per_chunk, r_total, need_mask, num_classes):
    """Per-(sample, split) partial intersection/union accumulation kernel."""

    def kernel(pred_ref, gt_ref, out_ref):
        # pred_ref: (1, C, R, 128) native dtype
        # gt_ref:   (1, R, 128)   native label dtype
        # out_ref:  (1, 2, 8, 128) f32: [0] = intersection partial, [1] = union partial
        t = pl.program_id(1)

        @pl.when(t == 0)
        def _init():
            out_ref[...] = jnp.zeros_like(out_ref)

        pred = pred_ref[0]                      # (C, R, 128), native dtype
        gt = gt_ref[0].astype(jnp.int32)        # (R, 128)
        C, R = pred.shape[0], pred.shape[1]

        row_ok = None
        if need_mask:
            # Logical (unclamped) row-block index of this tile; rows past the
            # padded spatial extent are forced to the invalid class.
            if splits > 1:
                tile = (pl.program_id(0) % splits) * tiles_per_chunk + t
            else:
                tile = t
            rows = tile * R + lax.broadcasted_iota(jnp.int32, (R, _LANES), 0)
            row_ok = rows < r_total
            gt = jnp.where(row_ok, gt, num_classes)

        # Fused one_hot(gt) * pred: select pred at the labelled class.
        cls = lax.broadcasted_iota(jnp.int32, (C, R, _LANES), 0)
        sel = jnp.where(gt[None] == cls, pred, 0)                  # native dtype
        # First reduction level (over C) in native dtype, then f32 accumulation.
        inter_rows = jnp.sum(sel, axis=0).astype(jnp.float32)      # (R, 128)
        pred_rows = jnp.sum(pred, axis=0).astype(jnp.float32)      # (R, 128)
        if need_mask:
            pred_rows = jnp.where(row_ok, pred_rows, 0.0)
        # sum(one_hot) == count of in-range labels (out-of-range one-hot is 0).
        valid_rows = ((gt >= 0) & (gt < C)).astype(jnp.float32)    # (R, 128)
        union_rows = pred_rows + valid_rows

        # VPU-only accumulation into (8,128) vectors; the single cross-lane
        # reduce happens once in the wrapper, not per tile.
        inter_p = inter_rows.reshape(R // _SUBLANES, _SUBLANES, _LANES).sum(axis=0)
        union_p = union_rows.reshape(R // _SUBLANES, _SUBLANES, _LANES).sum(axis=0)
        out_ref[0, 0] = out_ref[0, 0] + inter_p
        out_ref[0, 1] = out_ref[0, 1] + union_p

    return kernel


def dice_loss(y_pr, y_gt, *, eps=EPS, max_block_rows=None):
    """Matches DiceLoss().forward(y_pr, y_gt) == diceCoeffv2(y_pr, y_gt).

    y_pr: (N, C, H, W) activated predictions (any float dtype; kept native).
    y_gt: (N, H, W) or (N, 1, H, W) integer class labels (floats are truncated
          to int in-kernel, matching gt.long() in the reference).
    """
    N, C, H, W = y_pr.shape
    HW = H * W

    pred = y_pr.reshape(N, C, HW)
    gt = y_gt.reshape(N, HW)
    if gt.dtype == jnp.int64:                 # Pallas TPU is 32-bit
        gt = gt.astype(jnp.int32)

    # Sublane alignment for fully dense packed tiles (8 rows f32, 16 rows bf16, ...).
    sub = max(_SUBLANES, 32 // pred.dtype.itemsize, 32 // gt.dtype.itemsize)
    hw_align = sub * _LANES
    hw_pad = ((HW + hw_align - 1) // hw_align) * hw_align
    if hw_pad != HW:
        # Zero pred / invalid label => padded elements contribute nothing.
        pred = jnp.pad(pred, ((0, 0), (0, 0), (0, hw_pad - HW)))
        gt = jnp.pad(gt, ((0, 0), (0, hw_pad - HW)), constant_values=C)
    r_total = hw_pad // _LANES

    # Lane-dense (rows, 128) relayout: no sublane padding of gt / small-C pred.
    pred = pred.reshape(N, C, r_total, _LANES)
    gt = gt.reshape(N, r_total, _LANES)

    # ---- tile sizing against the true double-buffered VMEM footprint ----
    cap = _vmem_capacity_bytes()
    budget = min((6 * cap) // 10, 48 * 1024 * 1024)     # resident pred+gt, x2 buffers
    bytes_per_row = 2 * _LANES * (C * pred.dtype.itemsize + gt.dtype.itemsize)
    r_max = max(sub, (budget // bytes_per_row) // sub * sub)
    if max_block_rows is not None:
        r_max = max(sub, min(r_max, (max_block_rows // sub) * sub))
    block_rows = min(r_max, r_total)
    n_tiles = pl.cdiv(r_total, block_rows)

    # 2-way split of the reduction axis when the batch alone can't balance both
    # v7x TensorCores (odd / single N); negligible overhead on 1-TC chips.
    splits = 2 if (N % 2 == 1 and n_tiles >= 2) else 1
    tiles_per_chunk = pl.cdiv(n_tiles, splits)
    clamp = splits * tiles_per_chunk > n_tiles
    need_mask = splits * tiles_per_chunk * block_rows > r_total

    if splits == 1:
        pred_map = lambda p, t: (p, 0, t, 0)
        gt_map = lambda p, t: (p, t, 0)
    else:
        def _tile(p, t):
            tile = (p % splits) * tiles_per_chunk + t
            # Overshooting chunks re-read the last real block; their logical
            # rows are >= r_total so the in-kernel mask zeroes them out.
            return jnp.minimum(tile, n_tiles - 1) if clamp else tile
        pred_map = lambda p, t: (p // splits, 0, _tile(p, t), 0)
        gt_map = lambda p, t: (p // splits, _tile(p, t), 0)

    out_bytes = 2 * _SUBLANES * _LANES * 4
    resident = (2 * block_rows * _LANES
                * (C * pred.dtype.itemsize + gt.dtype.itemsize) + 2 * out_bytes)
    vmem_limit = int(min(cap * 9 // 10, max(resident + (8 << 20), 32 << 20)))

    partials = pl.pallas_call(
        _make_dice_kernel(splits, tiles_per_chunk, r_total, need_mask, C),
        out_shape=jax.ShapeDtypeStruct((N * splits, 2, _SUBLANES, _LANES), jnp.float32),
        grid_spec=pltpu.PrefetchScalarGridSpec(
            num_scalar_prefetch=0,
            grid=(N * splits, tiles_per_chunk),
            in_specs=[
                pl.BlockSpec((1, C, block_rows, _LANES), pred_map),
                pl.BlockSpec((1, block_rows, _LANES), gt_map),
            ],
            out_specs=pl.BlockSpec((1, 2, _SUBLANES, _LANES), lambda p, t: (p, 0, 0, 0)),
        ),
        compiler_params=pltpu.CompilerParams(
            dimension_semantics=("parallel", "arbitrary"),
            vmem_limit_bytes=vmem_limit,
        ),
    )(pred, gt)

    # Tiny final reduction + dice ratio in the wrapper (loss.sum() / N).
    stats = partials.reshape(N, splits, 2, _SUBLANES, _LANES).sum(axis=(1, 3, 4))
    intersection = stats[:, 0]
    union = stats[:, 1]
    loss = (2.0 * intersection + eps) / (union + eps)
    return jnp.sum(loss) / N


def _reference_dice(y_pr, y_gt, eps=EPS):
    # Pure-JAX diceCoeffv2 for self-checking.
    N, C, H, W = y_pr.shape
    gt = y_gt.reshape(N, H, W)
    onehot = jax.nn.one_hot(gt.astype(jnp.int32), C, axis=1, dtype=jnp.float32)
    pred_flat = y_pr.reshape(N, -1).astype(jnp.float32)
    gt_flat = onehot.reshape(N, -1)
    intersection = jnp.sum(pred_flat * gt_flat, axis=1)
    union = jnp.sum(pred_flat, axis=1) + jnp.sum(gt_flat, axis=1)
    loss = (2.0 * intersection + eps) / (union + eps)
    return jnp.sum(loss) / N


if __name__ == "__main__":
    key = jax.random.PRNGKey(0)

    cases = [
        # (N, C, H, W, pred dtype, max_block_rows, rtol)
        (2, 4, 16, 16, jnp.float32, None, 1e-4),   # canonical small case
        (1, 3, 20, 20, jnp.float32, None, 1e-4),   # HW not a multiple of 128 (pad path)
        (1, 3, 70, 70, jnp.float32, 16, 1e-4),     # multi-tile + 2-way split + row mask
        (2, 4, 16, 16, jnp.bfloat16, None, 2e-2),  # native bf16 streaming path
    ]
    out = None
    for i, (n, c, h, w, dtype, mbr, rtol) in enumerate(cases):
        k1, k2 = jax.random.split(jax.random.fold_in(key, i))
        y_pr = jax.nn.sigmoid(jax.random.normal(k1, (n, c, h, w), jnp.float32)).astype(dtype)
        y_gt = jax.random.randint(k2, (n, 1, h, w), 0, c, dtype=jnp.int32)
        out = jax.block_until_ready(dice_loss(y_pr, y_gt, max_block_rows=mbr))
        ref = _reference_dice(y_pr, y_gt)
        assert jnp.allclose(out, ref, rtol=rtol, atol=1e-5), (i, float(out), float(ref))

    print("KERNEL_OK")
</pallas_src>

<mosaic_0001>
module attributes {stable_mosaic.version = 11 : i64} {
  func.func @kernel(%arg0: i32, %arg1: i32, %arg2: memref<1x4x8x128xf32, #tpu.memory_space<vmem>>, %arg3: memref<1x8x128xi32, #tpu.memory_space<vmem>>, %arg4: memref<1x2x8x128xf32, #tpu.memory_space<vmem>>) attributes {dimension_semantics = [#tpu.dimension_semantics<parallel>, #tpu.dimension_semantics<arbitrary>], iteration_bounds = array<i64: 2, 1>, scalar_prefetch = 0 : i64, scratch_operands = 0 : i64, tpu.core_type = #tpu.core_type<tc>, window_params = [{transform_indices = @transform_0, window_bounds = array<i64: 1, 4, 8, 128>}, {transform_indices = @transform_1, window_bounds = array<i64: 1, 8, 128>}, {transform_indices = @transform_2, window_bounds = array<i64: 1, 2, 8, 128>}]} {
    %c0_i32 = arith.constant 0 : i32
    %0 = arith.cmpi eq, %arg1, %c0_i32 : i32
    %1 = arith.extui %0 : i1 to i32
    %c0_i32_0 = arith.constant 0 : i32
    %2 = arith.cmpi ne, %1, %c0_i32_0 : i32
    scf.if %2 {
      %cst_27 = arith.constant 0.000000e+00 : f32
      %40 = vector.broadcast %cst_27 : f32 to vector<1x2x8x128xf32>
      %c0_28 = arith.constant 0 : index
      %c0_29 = arith.constant 0 : index
      %c0_30 = arith.constant 0 : index
      %c0_31 = arith.constant 0 : index
      %41 = vector.load %arg4[%c0_28, %c0_29, %c0_30, %c0_31] : memref<1x2x8x128xf32, #tpu.memory_space<vmem>>, vector<1x2x8x128xf32>
      tpu.vector_store %arg4[%c0_28, %c0_29, %c0_30, %c0_31], %40 {strides = array<i32>} : memref<1x2x8x128xf32, #tpu.memory_space<vmem>>, vector<1x2x8x128xf32>,
    } else {
    }
    %c0 = arith.constant 0 : index
    %c0_1 = arith.constant 0 : index
    %c0_2 = arith.constant 0 : index
    %c0_3 = arith.constant 0 : index
    %3 = vector.load %arg2[%c0, %c0_1, %c0_2, %c0_3] : memref<1x4x8x128xf32, #tpu.memory_space<vmem>>, vector<1x4x8x128xf32>
    %4 = vector.shape_cast %3 : vector<1x4x8x128xf32> to vector<4x8x128xf32>
    %c0_4 = arith.constant 0 : index
    %c0_5 = arith.constant 0 : index
    %c0_6 = arith.constant 0 : index
    %5 = vector.load %arg3[%c0_4, %c0_5, %c0_6] : memref<1x8x128xi32, #tpu.memory_space<vmem>>, vector<1x8x128xi32>
    %6 = vector.shape_cast %5 : vector<1x8x128xi32> to vector<8x128xi32>
    %7 = tpu.iota {dimensions = array<i32: 0>} : vector<4x8x128xi32>
    %8 = vector.shape_cast %6 : vector<8x128xi32> to vector<1x8x128xi32>
    %9 = vector.broadcast %8 : vector<1x8x128xi32> to vector<4x8x128xi32>
    %10 = arith.cmpi eq, %9, %7 : vector<4x8x128xi32>
    %c0_i32_7 = arith.constant 0 : i32
    %11 = arith.sitofp %c0_i32_7 : i32 to f32
    %12 = vector.broadcast %11 : f32 to vector<4x8x128xf32>
    %13 = arith.select %10, %4, %12 : vector<4x8x128xi1>, vector<4x8x128xf32>
    %cst = arith.constant dense<0.000000e+00> : vector<8x128xf32>
    %14 = vector.multi_reduction <add>, %13, %cst [0] : vector<4x8x128xf32> to vector<8x128xf32>
    %cst_8 = arith.constant dense<0.000000e+00> : vector<8x128xf32>
    %15 = vector.multi_reduction <add>, %4, %cst_8 [0] : vector<4x8x128xf32> to vector<8x128xf32>
    %c0_i32_9 = arith.constant 0 : i32
    %16 = vector.broadcast %c0_i32_9 : i32 to vector<8x128xi32>
    %17 = arith.cmpi sge, %6, %16 : vector<8x128xi32>
    %c4_i32 = arith.constant 4 : i32
    %18 = vector.broadcast %c4_i32 : i32 to vector<8x128xi32>
    %19 = arith.cmpi slt, %6, %18 : vector<8x128xi32>
    %20 = arith.andi %17, %19 : vector<8x128xi1>
    %21 = arith.extui %20 : vector<8x128xi1> to vector<8x128xi32>
    %22 = arith.sitofp %21 : vector<8x128xi32> to vector<8x128xf32>
    %23 = arith.addf %15, %22 : vector<8x128xf32>
    %24 = vector.shape_cast %14 : vector<8x128xf32> to vector<1x8x128xf32>
    %cst_10 = arith.constant dense<0.000000e+00> : vector<8x128xf32>
    %25 = vector.multi_reduction <add>, %24, %cst_10 [0] : vector<1x8x128xf32> to vector<8x128xf32>
    %26 = vector.shape_cast %23 : vector<8x128xf32> to vector<1x8x128xf32>
    %cst_11 = arith.constant dense<0.000000e+00> : vector<8x128xf32>
    %27 = vector.multi_reduction <add>, %26, %cst_11 [0] : vector<1x8x128xf32> to vector<8x128xf32>
    %c0_12 = arith.constant 0 : index
    %c0_13 = arith.constant 0 : index
    %c0_14 = arith.constant 0 : index
    %c0_15 = arith.constant 0 : index
    %28 = vector.load %arg4[%c0_12, %c0_13, %c0_14, %c0_15] : memref<1x2x8x128xf32, #tpu.memory_space<vmem>>, vector<1x1x8x128xf32>
    %29 = vector.shape_cast %28 : vector<1x1x8x128xf32> to vector<8x128xf32>
    %30 = arith.addf %29, %25 : vector<8x128xf32>
    %c0_16 = arith.constant 0 : index
    %c0_17 = arith.constant 0 : index
    %c0_18 = arith.constant 0 : index
    %c0_19 = arith.constant 0 : index
    %31 = vector.load %arg4[%c0_16, %c0_17, %c0_18, %c0_19] : memref<1x2x8x128xf32, #tpu.memory_space<vmem>>, vector<1x1x8x128xf32>
    %32 = vector.shape_cast %31 : vector<1x1x8x128xf32> to vector<8x128xf32>
    %33 = vector.shape_cast %30 : vector<8x128xf32> to vector<1x1x8x128xf32>
    tpu.vector_store %arg4[%c0_16, %c0_17, %c0_18, %c0_19], %33 {strides = array<i32>} : memref<1x2x8x128xf32, #tpu.memory_space<vmem>>, vector<1x1x8x128xf32>,
    %c0_20 = arith.constant 0 : index
    %c1 = arith.constant 1 : index
    %c0_21 = arith.constant 0 : index
    %c0_22 = arith.constant 0 : index
    %34 = vector.load %arg4[%c0_20, %c1, %c0_21, %c0_22] : memref<1x2x8x128xf32, #tpu.memory_space<vmem>>, vector<1x1x8x128xf32>
    %35 = vector.shape_cast %34 : vector<1x1x8x128xf32> to vector<8x128xf32>
    %36 = arith.addf %35, %27 : vector<8x128xf32>
    %c0_23 = arith.constant 0 : index
    %c1_24 = arith.constant 1 : index
    %c0_25 = arith.constant 0 : index
    %c0_26 = arith.constant 0 : index
    %37 = vector.load %arg4[%c0_23, %c1_24, %c0_25, %c0_26] : memref<1x2x8x128xf32, #tpu.memory_space<vmem>>, vector<1x1x8x128xf32>
    %38 = vector.shape_cast %37 : vector<1x1x8x128xf32> to vector<8x128xf32>
    %39 = vector.shape_cast %36 : vector<8x128xf32> to vector<1x1x8x128xf32>
    tpu.vector_store %arg4[%c0_23, %c1_24, %c0_25, %c0_26], %39 {strides = array<i32>} : memref<1x2x8x128xf32, #tpu.memory_space<vmem>>, vector<1x1x8x128xf32>,
    return
  }
  func.func @transform_0(%arg0: i32, %arg1: i32) -> (i32, i32, i32, i32) {
    %c0_i32 = arith.constant 0 : i32
    %c0_i32_0 = arith.constant 0 : i32
    %c0_i32_1 = arith.constant 0 : i32
    return %arg0, %c0_i32, %arg1, %c0_i32_0 : i32, i32, i32, i32
  }
  func.func @transform_1(%arg0: i32, %arg1: i32) -> (i32, i32, i32) {
    %c0_i32 = arith.constant 0 : i32
    %c0_i32_0 = arith.constant 0 : i32
    return %arg0, %arg1, %c0_i32 : i32, i32, i32
  }
  func.func @transform_2(%arg0: i32, %arg1: i32) -> (i32, i32, i32, i32) {
    %c0_i32 = arith.constant 0 : i32
    %c0_i32_0 = arith.constant 0 : i32
    %c0_i32_1 = arith.constant 0 : i32
    %c0_i32_2 = arith.constant 0 : i32
    return %arg0, %c0_i32, %c0_i32_0, %c0_i32_1 : i32, i32, i32, i32
  }
}

</mosaic_0001>

<llo_original>
// kernel: tpu_custom_call.1
$region0: #{tpu_custom_call.1}
  #allocation0 [shape = 'u32[]', space=smem, size = 0x4, offset = 0x4, fixed_abs, tag = 'smem constant byte address 0x4 - core index']
  #allocation1 [shape = 'u32[144,128]{1,0:T(1,128)}', space=vmem, size = 0x12000, scoped, tag = 'internal scratch']
  %s0 = inlined_call_operand.hbm [shape: f32[2,4,8,128], index: 0, kind: input, shape index: {}]
  %s1 = inlined_call_operand.hbm [shape: s32[2,8,128], index: 1, kind: input, shape index: {}]
  %s2 = inlined_call_operand.hbm [shape: f32[2,2,8,128], index: 2, kind: output, shape index: {}]
  %s3 = sld [smem:[#allocation0]]
  $region53: #{tpu_custom_call.1} parent=0
    _
  %s5 = ssub.s32 1, %s3
  %s6 = scalar_select 0, %s5, %s3
  $region1: #{tpu_custom_call.1} parent=0
    #allocation2 [shape = 'u8[32768]{0}', space=vmem, size = 0x8000, scoped, tag = 'input window, operand 0']
    #allocation3 [shape = 's32[2]{0}', space=sflag, size = 0x8, scoped, tag = 'scoped memory for tpu_custom_call.1']
    #allocation4 [shape = 's32[2]{0}', space=sflag, size = 0x8, scoped, tag = 'scoped memory for tpu_custom_call.1']
    #allocation5 [shape = 'u8[8192]{0}', space=vmem, size = 0x2000, scoped, tag = 'input window, operand 1']
    #allocation6 [shape = 's32[2]{0}', space=sflag, size = 0x8, scoped, tag = 'scoped memory for tpu_custom_call.1']
    #allocation7 [shape = 'u8[16384]{0}', space=vmem, size = 0x4000, scoped, tag = 'output window, operand 0']
    %7 = vsyncpa [#allocation3], 0
    %s8 = scalar_lea.sflag [#allocation3], 1
    %9 = vsyncpa %s8, 0
    %10 = vsyncpa [#allocation6], 0
    %s11 = scalar_lea.sflag [#allocation6], 1
    %12 = vsyncpa %s11, 0
    %13 = vsyncpa [#allocation4], 0
    %s14 = scalar_lea.sflag [#allocation4], 1
    %15 = vsyncpa %s14, 0
    loop: start=0, step=1, limit=4
    $region2: #{tpu_custom_call.1} parent=1 // loop_pre_header
      _
    $region3: #{tpu_custom_call.1} parent=1 // loop_header
      %s17 = sphi 0, %s21
      %p18 = scmp.ge.s32.totalorder %s17, 4
      %s24 = sphi 0, %s36
      %s25 = sphi 0, %s32
      %s26 = sphi 0, %s24
      %s27 = sphi 0, %s25
      %s28 = sphi 0, %s26
      %s29 = sphi 0, %s27
      %s41 = sphi 0, %s43
      %s44 = sphi 0, %s41
      %s45 = sphi 0, %s44
      %s61 = sphi 0, %s45
      %s69 = sphi 0, %s71
      %s72 = sphi 0, %s69
      %s73 = sphi 0, %s72
      %s89 = sphi 0, %s73
      %s95 = sphi 0, %s97
      %s98 = sphi 0, %s95
      %s99 = sphi 0, %s98
      %s115 = sphi 0, %s99
    $region4: #{tpu_custom_call.1} parent=1 // loop_header_branch
      %20 = sbr.rel (%p18) target = $region8
    $region5: #{tpu_custom_call.1} parent=1 // loop_body
      %s22 = ssub.s32 %s17, 1
      %s23 = ssub.s32 %s17, 2
      %s30 = sadd.s32 1, %s25
      %p31 = scmp.ge.s32.totalorder %s30, 1
      %s32 = scalar_select %p31, 0, %s30
      %s33 = sadd.s32 1, %s24
      %s34 = scalar_select %p31, %s33, %s24
      %p35 = scmp.ge.s32.totalorder %s34, 2
      %s36 = scalar_select %p35, 0, %s34
      %s37 = ssub.s32 %s24, %s36
      %s38 = ssub.s32 %s25, %s32
      %s39 = sor.u32 %s37, %s38
      %p40 = scmp.eq.s32.totalorder %s39, 0
      %s42 = sadd.s32 %s41, 1
      %s43 = scalar_select %p40, %s41, %s42
      %p46 = pneg %p40
      %p47 = scmp.eq.s32.totalorder %s17, 1
      %p48 = por %p46, %p47
      %p49 = scmp.ne.s32.totalorder %s41, %s44
      %p50 = scmp.eq.s32.totalorder %s17, 0
      %p51 = por %p49, %p50
      %p52 = scmp.ne.s32.totalorder %s41, %s44
      %p53 = scmp.eq.s32.totalorder %s22, 1
      %p54 = por %p52, %p53
      %p55 = scmp.ne.s32.totalorder %s44, %s45
      %p56 = scmp.eq.s32.totalorder %s22, 0
      %p57 = por %p55, %p56
      %p58 = scmp.ne.s32.totalorder %s44, %s45
      %p59 = scmp.eq.s32.totalorder %s23, 1
      %p60 = por %p58, %p59
      %p62 = scmp.ne.s32.totalorder %s45, %s61
      %p63 = scmp.eq.s32.totalorder %s23, 0
      %p64 = por %p62, %p63
      %s65 = ssub.s32 %s24, %s36
      %s66 = ssub.s32 %s25, %s32
      %s67 = sor.u32 %s65, %s66
      %p68 = scmp.eq.s32.totalorder %s67, 0
      %s70 = sadd.s32 %s69, 1
      %s71 = scalar_select %p68, %s69, %s70
      %p74 = pneg %p68
      %p75 = scmp.eq.s32.totalorder %s17, 1
      %p76 = por %p74, %p75
      %p77 = scmp.ne.s32.totalorder %s69, %s72
      %p78 = scmp.eq.s32.totalorder %s17, 0
      %p79 = por %p77, %p78
      %p80 = scmp.ne.s32.totalorder %s69, %s72
      %p81 = scmp.eq.s32.totalorder %s22, 1
      %p82 = por %p80, %p81
      %p83 = scmp.ne.s32.totalorder %s72, %s73
      %p84 = scmp.eq.s32.totalorder %s22, 0
      %p85 = por %p83, %p84
      %p86 = scmp.ne.s32.totalorder %s72, %s73
      %p87 = scmp.eq.s32.totalorder %s23, 1
      %p88 = por %p86, %p87
      %p90 = scmp.ne.s32.totalorder %s73, %s89
      %p91 = scmp.eq.s32.totalorder %s23, 0
      %p92 = por %p90, %p91
      %s93 = ssub.s32 %s24, %s36
      %p94 = scmp.eq.s32.totalorder %s93, 0
      %s96 = sadd.s32 %s95, 1
      %s97 = scalar_select %p94, %s95, %s96
      %p100 = pneg %p94
      %p101 = scmp.eq.s32.totalorder %s17, 1
      %p102 = por %p100, %p101
      %p103 = scmp.ne.s32.totalorder %s95, %s98
      %p104 = scmp.eq.s32.totalorder %s17, 0
      %p105 = por %p103, %p104
      %p106 = scmp.ne.s32.totalorder %s95, %s98
      %p107 = scmp.eq.s32.totalorder %s22, 1
      %p108 = por %p106, %p107
      %p109 = scmp.ne.s32.totalorder %s98, %s99
      %p110 = scmp.eq.s32.totalorder %s22, 0
      %p111 = por %p109, %p110
      %p112 = scmp.ne.s32.totalorder %s98, %s99
      %p113 = scmp.eq.s32.totalorder %s23, 1
      %p114 = por %p112, %p113
      %p116 = scmp.ne.s32.totalorder %s99, %s115
      %p117 = scmp.eq.s32.totalorder %s23, 0
      %p118 = por %p116, %p117
      %p119 = scmp.le.s32.totalorder 1, %s17
      %p120 = scmp.lt.s32.totalorder %s17, 3
      %p121 = pnand %p119, %p120
      %p122 = pneg %p121
      // Predicated region
      $region9: #{tpu_custom_call.1} parent=5 // pred_check
        _
      $region10: #{tpu_custom_call.1} parent=5 // pred_check_branch
        %124 = sbr.rel (%p121) target = $region12
      $region11: #{tpu_custom_call.1} parent=5 // pred_region
        %s125 = ssub.s32 %s17, 1
      $region12: #{tpu_custom_call.1} parent=5 // pred_fallthru
        _
      %p126 = scmp.lt.s32.totalorder %s17, 2
      // Predicated region
      $region13: #{tpu_custom_call.1} parent=5 // pred_check
        %p127 = pneg %p126
      $region14: #{tpu_custom_call.1} parent=5 // pred_check_branch
        %129 = sbr.rel (%p127) target = $region16
      $region15: #{tpu_custom_call.1} parent=5 // pred_region
        // Predicated region
        $region17: #{tpu_custom_call.1} parent=15 // pred_check
          %p130 = pneg %p51
        $region18: #{tpu_custom_call.1} parent=15 // pred_check_branch
          %132 = sbr.rel (%p130) target = $region20
        $region19: #{tpu_custom_call.1} parent=15 // pred_region
          %s133 = sand.u32 %s41, 1
          %s134 = scalar_lea.sflag [#allocation3], %s133
          %s135 = sand.u32 %s41, 1
          %s136 = smul.addr %s135, 32
          %s137 = scalar_lea.vmem [#allocation2], %s136
          %s139 = ssub.s32 512, 512
          %140 = vsyncadd %s134, %s139
          %s141 = smul.addr %s24, 4
          %s142 = sadd.s32 %s25, %s141
          %s143 = smul.addr %s142, 128
          %s144 = scalar_lea.hbm %s0, %s143
          %s145 = sshll.u32 %s137, 4
          %s146 = int_to_ptr.vmem [resolvable:$true] %s145
          %151 = dma.hbm_to_vmem [thread:$0]  %s144, 512, %s146, %s134, 128, 128, 8
        $region20: #{tpu_custom_call.1} parent=15 // pred_fallthru
          _
        // Predicated region
        $region21: #{tpu_custom_call.1} parent=15 // pred_check
          %p152 = pneg %p79
        $region22: #{tpu_custom_call.1} parent=15 // pred_check_branch
          %154 = sbr.rel (%p152) target = $region24
        $region23: #{tpu_custom_call.1} parent=15 // pred_region
          %s155 = sand.u32 %s69, 1
          %s156 = scalar_lea.sflag [#allocation6], %s155
          %s157 = sand.u32 %s69, 1
          %s158 = smul.addr %s157, 8
          %s159 = scalar_lea.vmem [#allocation5], %s158
          %s161 = ssub.s32 128, 128
          %162 = vsyncadd %s156, %s161
          %s163 = sadd.s32 %s25, %s24
          %s164 = smul.addr %s163, 128
          %s165 = scalar_lea.hbm %s1, %s164
          %s167 = sshll.u32 %s159, 4
          %s168 = int_to_ptr.vmem [resolvable:$true] %s167
          %170 = dma.hbm_to_vmem [thread:$0]  %s165, 128, %s168, %s156
        $region24: #{tpu_custom_call.1} parent=15 // pred_fallthru
          _
      $region16: #{tpu_custom_call.1} parent=5 // pred_fallthru
        _
      %p171 = scmp.le.s32.totalorder 1, %s17
      %p172 = scmp.lt.s32.totalorder %s17, 3
      %p173 = pnand %p171, %p172
      %p174 = pneg %p173
      // Predicated region
      $region25: #{tpu_custom_call.1} parent=5 // pred_check
        _
      $region26: #{tpu_custom_call.1} parent=5 // pred_check_branch
        %176 = sbr.rel (%p173) target = $region28
      $region27: #{tpu_custom_call.1} parent=5 // pred_region
        %s177 = ssub.s32 %s17, 1
        %s178 = sand.u32 %s44, 1
        %s179 = scalar_lea.sflag [#allocation3], %s178
        %s180 = sand.u32 %s44, 1
        %s181 = smul.addr %s180, 32
        %s182 = scalar_lea.vmem [#allocation2], %s181
        // Predicated region
        $region29: #{tpu_custom_call.1} parent=27 // pred_check
          %p183 = pneg %p57
        $region30: #{tpu_custom_call.1} parent=27 // pred_check_branch
          %185 = sbr.rel (%p183) target = $region32
        $region31: #{tpu_custom_call.1} parent=27 // pred_region
          %186 = dma.done %s179, 512
        $region32: #{tpu_custom_call.1} parent=27 // pred_fallthru
          _
        %s187 = sand.u32 %s72, 1
        %s188 = scalar_lea.sflag [#allocation6], %s187
        %s189 = sand.u32 %s72, 1
        %s190 = smul.addr %s189, 8
        %s191 = scalar_lea.vmem [#allocation5], %s190
        // Predicated region
        $region33: #{tpu_custom_call.1} parent=27 // pred_check
          %p192 = pneg %p85
        $region34: #{tpu_custom_call.1} parent=27 // pred_check_branch
          %194 = sbr.rel (%p192) target = $region36
        $region35: #{tpu_custom_call.1} parent=27 // pred_region
          %195 = dma.done %s188, 128
        $region36: #{tpu_custom_call.1} parent=27 // pred_fallthru
          _
        %s196 = sand.u32 %s44, 1
        %s197 = scalar_lea.sflag [#allocation3], %s196
        %s198 = sand.u32 %s44, 1
        %s199 = smul.addr %s198, 32
        %s200 = scalar_lea.vmem [#allocation2], %s199
        %p201 = pneg %p57
        %p202 = pneg %p54
        %s203 = sand.u32 %s72, 1
        %s204 = scalar_lea.sflag [#allocation6], %s203
        %s205 = sand.u32 %s72, 1
        %s206 = smul.addr %s205, 8
        %s207 = scalar_lea.vmem [#allocation5], %s206
        %p208 = pneg %p85
        %p209 = pneg %p82
        %p210 = pneg %p111
        %p211 = pneg %p108
        %s212 = sand.u32 %s98, 1
        %s213 = scalar_lea.sflag [#allocation4], %s212
        %s214 = sand.u32 %s98, 1
        %s215 = smul.addr %s214, 16
        %s216 = scalar_lea.vmem [#allocation7], %s215
        %p217 = scmp.eq.s32.totalorder %s27, 0
        // Predicated region
        $region37: #{tpu_custom_call.1} parent=27 // pred_check
          %p218 = pneg %p217
        $region38: #{tpu_custom_call.1} parent=27 // pred_check_branch
          %220 = sbr.rel (%p218) target = $region40
        $region39: #{tpu_custom_call.1} parent=27 // pred_region
          %221 = vst [vmem:[%s216] sm:$0xff] 0.0
          %222 = vst [vmem:[%s216 + $0x8] sm:$0xff] 0.0
        $region40: #{tpu_custom_call.1} parent=27 // pred_fallthru
          _
        %v223 = vld [vmem:[%s182] sm:$0xff]
        %v224 = vld [vmem:[%s182 + $0x8] sm:$0xff]
        %v225 = vld [vmem:[%s182 + $0x10] sm:$0xff]
        %v226 = vld [vmem:[%s182 + $0x18] sm:$0xff]
        %v227 = vld [vmem:[%s191] sm:$0xff]
        %vm228 = vcmp.eq.s32.totalorder %v227, 0
        %vm229 = vcmp.eq.s32.totalorder %v227, 1
        %vm230 = vcmp.eq.s32.totalorder %v227, 2
        %vm231 = vcmp.eq.s32.totalorder %v227, 3
        %v232 = vsel %vm228, %v223, 0.0
        %v233 = vsel %vm229, %v224, 0.0
        %v234 = vsel %vm230, %v225, 0.0
        %v235 = vsel %vm231, %v226, 0.0
        %v236 = vadd.f32 %v232, %v233
        %v237 = vadd.f32 %v236, %v234
        %v238 = vadd.f32 %v237, %v235
        %v239 = vadd.f32 %v223, %v224
        %v240 = vadd.f32 %v239, %v225
        %v241 = vadd.f32 %v240, %v226
        %vm242 = vcmp.ge.s32.totalorder %v227, 0
        %vm243 = vcmp.lt.s32.totalorder %v227, 4
        %vm244 = vmand %vm242, %vm243
        %v245 = vsel %vm244, 1, 0
        %v246 = vcvt.s32.f32 %v245
        %v247 = vadd.f32 %v241, %v246
        %v248 = vadd.f32 %v238, 0.0
        %v249 = vadd.f32 %v247, 0.0
        %v250 = vld [vmem:[%s216] sm:$0xff]
        %v251 = vadd.f32 %v250, %v248
        %252 = vst [vmem:[%s216] sm:$0xff] %v251
        %s253 = scalar_lea.vmem %s216, 8 [#allocation7]
        %v254 = vld [vmem:[%s253] sm:$0xff]
        %v255 = vadd.f32 %v254, %v249
        %256 = vst [vmem:[%s253] sm:$0xff] %v255
        %s257 = sand.u32 %s98, 1
        %s258 = scalar_lea.sflag [#allocation4], %s257
        %s259 = sand.u32 %s98, 1
        %s260 = smul.addr %s259, 16
        %s261 = scalar_lea.vmem [#allocation7], %s260
        // Predicated region
        $region41: #{tpu_custom_call.1} parent=27 // pred_check
          %p262 = pneg %p108
        $region42: #{tpu_custom_call.1} parent=27 // pred_check_branch
          %264 = sbr.rel (%p262) target = $region44
        $region43: #{tpu_custom_call.1} parent=27 // pred_region
          %s266 = ssub.s32 256, 256
          %267 = vsyncadd %s258, %s266
          %s268 = smul.addr %s26, 2
          %s269 = smul.addr %s268, 128
          %s270 = scalar_lea.hbm %s2, %s269
          %s271 = sshll.u32 %s261, 4
          %s272 = int_to_ptr.vmem [resolvable:$true] %s271
          %277 = dma.vmem_to_hbm [thread:$0]  %s272, 256, %s270, %s258, 128, 128, 8
        $region44: #{tpu_custom_call.1} parent=27 // pred_fallthru
          _
      $region28: #{tpu_custom_call.1} parent=5 // pred_fallthru
        _
      %p278 = scmp.le.s32.totalorder 2, %s17
      // Predicated region
      $region45: #{tpu_custom_call.1} parent=5 // pred_check
        %p279 = pneg %p278
      $region46: #{tpu_custom_call.1} parent=5 // pred_check_branch
        %281 = sbr.rel (%p279) target = $region48
      $region47: #{tpu_custom_call.1} parent=5 // pred_region
        %s282 = ssub.s32 %s17, 2
        // Predicated region
        $region49: #{tpu_custom_call.1} parent=47 // pred_check
          %p283 = pneg %p114
        $region50: #{tpu_custom_call.1} parent=47 // pred_check_branch
          %285 = sbr.rel (%p283) target = $region52
        $region51: #{tpu_custom_call.1} parent=47 // pred_region
          %s286 = sand.u32 %s99, 1
          %s287 = scalar_lea.sflag [#allocation4], %s286
          %s288 = sand.u32 %s99, 1
          %s289 = smul.addr %s288, 16
          %s290 = scalar_lea.vmem [#allocation7], %s289
          %291 = dma.done %s287, 256
        $region52: #{tpu_custom_call.1} parent=47 // pred_fallthru
          _
      $region48: #{tpu_custom_call.1} parent=5 // pred_fallthru
        _
    $region6: #{tpu_custom_call.1} parent=1 // loop_footer
      %s21 = sadd.s32 1, %s17
    $region7: #{tpu_custom_call.1} parent=1 // loop_footer_branch
      %16 = sbr.rel target = $region3
    $region8: #{tpu_custom_call.1} parent=1 // loop_exit
      _
    %292 = vsyncpa [#allocation3], 1
    %s293 = scalar_lea.sflag [#allocation3], 1
    %294 = vsyncpa %s293, 1
    %295 = vsyncpa [#allocation6], 1
    %s296 = scalar_lea.sflag [#allocation6], 1
    %297 = vsyncpa %s296, 1
    %298 = vsyncpa [#allocation4], 1
    %s299 = scalar_lea.sflag [#allocation4], 1
    %300 = vsyncpa %s299, 1

</llo_original>
